<compile_context>
chip_gen: v7x
topology: tpu7x:2x2x1
jax: 0.10.0
libtpu: 0.0.40
codegen_flags: <defaults>
</compile_context>

<pallas_src>
import numpy as np

import jax
import jax.numpy as jnp
from jax.experimental import pallas as pl
from jax.experimental.pallas import tpu as pltpu


# ----------------------------------------------------------------------------------------
# Kernel
# ----------------------------------------------------------------------------------------
def make_film_kernel(n_cond, compute_dtype):
    """Build the fused FiLM kernel for `n_cond` conditioning inputs.

    Per (bm, H) batch tile:
        ce    = sum_i cond_i @ W_cond_i                      (fused concat, f32 acc)
        scale = SiLU(ce[:, :H] + b_scale)
        shift = SiLU(ce[:, H:] + b_shift)
        h     = LayerNorm(x @ W_proj + b_proj)               (eps=1e-5, affine)
        out   = SiLU(h * scale + shift) + x
    """
    cdt = np.dtype(compute_dtype)

    def film_kernel(x_ref, *refs):
        cond_refs = refs[:n_cond]
        wc_refs = refs[n_cond:2 * n_cond]
        wp_ref = refs[2 * n_cond]
        p_ref = refs[2 * n_cond + 1]
        o_ref = refs[2 * n_cond + 2]

        H = x_ref.shape[-1]
        p = p_ref[...]                                     # (8, H) f32 packed per-feature vectors
        b_scale, b_shift = p[0:1, :], p[1:2, :]
        b_proj, gamma, beta = p[2:3, :], p[3:4, :], p[4:5, :]

        # --- conditional MLP: single 2H-wide matmul, concat fused as K-split (MXU) --------
        ce = jnp.dot(cond_refs[0][...].astype(cdt), wc_refs[0][...],
                     preferred_element_type=jnp.float32)
        for c_ref, w_ref in zip(cond_refs[1:], wc_refs[1:]):
            ce = ce + jnp.dot(c_ref[...].astype(cdt), w_ref[...],
                              preferred_element_type=jnp.float32)
        scale = ce[:, :H] + b_scale
        scale = scale * jax.nn.sigmoid(scale)              # SiLU
        shift = ce[:, H:] + b_shift
        shift = shift * jax.nn.sigmoid(shift)              # SiLU

        # --- proj: Linear(H -> H), f32 accumulation ---------------------------------------
        h = jnp.dot(x_ref[...].astype(cdt), wp_ref[...],
                    preferred_element_type=jnp.float32) + b_proj

        # --- LayerNorm over last dim (f32); var = E[h^2] - mu^2 saves one (bm,H) pass -----
        mu = jnp.mean(h, axis=-1, keepdims=True)
        var = jnp.mean(h * h, axis=-1, keepdims=True) - mu * mu
        h = (h - mu) * jax.lax.rsqrt(var + 1e-5)
        h = h * gamma + beta

        # --- FiLM modulation + SiLU + residual (x re-read -> short f32 live range) --------
        h = h * scale + shift
        h = h * jax.nn.sigmoid(h)
        o_ref[...] = (h + x_ref[...].astype(jnp.float32)).astype(o_ref.dtype)

    return film_kernel


# ----------------------------------------------------------------------------------------
# One-time parameter preparation (hoisted out of the per-call path)
# ----------------------------------------------------------------------------------------
def prepare_film_params(params, cond_dims, *, compute_dtype=jnp.bfloat16):
    """Cast weights to the compute dtype, split W_cond rows per conditioning input
    (so the concat can be fused as K-split matmuls), and pack the five per-feature
    vectors into a single (8, H) f32 operand.  Call once, reuse for every forward."""
    cdt = np.dtype(compute_dtype)
    w_cond = jnp.asarray(params["w_cond"])
    Tc, twoH = w_cond.shape
    H = twoH // 2
    if sum(cond_dims) != Tc:
        raise ValueError(f"sum(cond_dims)={sum(cond_dims)} must equal W_cond rows {Tc}")

    offs = np.cumsum((0,) + tuple(cond_dims))
    w_parts = tuple(w_cond[int(offs[i]):int(offs[i + 1])].astype(cdt)
                    for i in range(len(cond_dims)))

    b_cond = jnp.asarray(params["b_cond"], jnp.float32)
    rows = jnp.stack([b_cond[:H], b_cond[H:],
                      jnp.asarray(params["b_proj"], jnp.float32),
                      jnp.asarray(params["gamma"], jnp.float32),
                      jnp.asarray(params["beta"], jnp.float32)])
    packed = jnp.pad(rows, ((0, 8 - rows.shape[0]), (0, 0)))

    return {
        "w_cond_parts": w_parts,
        "w_proj": jnp.asarray(params["w_proj"]).astype(cdt),
        "packed": packed,
        "compute_dtype": cdt,
        "hidden_dim": H,
        "cond_dims": tuple(cond_dims),
    }


# ----------------------------------------------------------------------------------------
# Wrapper
# ----------------------------------------------------------------------------------------
def _round_up(a, b):
    return (a + b - 1) // b * b


def _pick_bm(B, sub, cap=2048):
    """Tile height: multiple of the sublane count, capped at `cap` rows; prefer 2 grid
    steps for moderate batches (DMA pipelining / megacore), ragged tails are masked."""
    cap = max(_round_up(cap, sub), sub)
    if B < 2 * sub:
        return _round_up(max(B, sub), sub)
    if B <= 2 * cap:
        return min(_round_up(pl.cdiv(B, 2), sub), cap)
    return cap


def film_layer(x, conds, prepared, *, bm=None):
    B, H = x.shape
    w_parts = prepared["w_cond_parts"]
    w_proj = prepared["w_proj"]
    packed = prepared["packed"]
    cdt = prepared["compute_dtype"]
    if len(conds) != len(w_parts):
        raise ValueError("number of conditioning inputs must match prepare_film_params(cond_dims=...)")
    for c, w in zip(conds, w_parts):
        if c.shape != (B, w.shape[0]):
            raise ValueError(f"conditioning input shape {c.shape} != ({B}, {w.shape[0]})")

    # Row-tile alignment: widest sublane requirement across the row-tiled activations.
    sub = max(max(32 // a.dtype.itemsize, 8) for a in (x, *conds))
    if bm is None:
        bm = _pick_bm(B, sub)
    if bm % sub:
        raise ValueError(f"bm={bm} must be a multiple of {sub}")
    bm = min(bm, _round_up(B, sub))
    grid = (pl.cdiv(B, bm),)          # ragged tail -> Pallas-masked partial last block

    # VMEM budget: double-buffered activation tiles + resident weights, with headroom for
    # f32 intermediates.  Never claim v7x's full 64 MiB physical VMEM.
    act_bytes = (2 * bm * H * x.dtype.itemsize
                 + sum(bm * c.shape[1] * c.dtype.itemsize for c in conds))
    wt_bytes = (sum(int(np.prod(w.shape)) * w.dtype.itemsize for w in w_parts)
                + int(np.prod(w_proj.shape)) * w_proj.dtype.itemsize
                + int(np.prod(packed.shape)) * packed.dtype.itemsize)
    footprint = 2 * (act_bytes + wt_bytes)                     # double-buffered
    vmem_limit = int(min(48 * 1024 * 1024, max(2 * footprint + (8 << 20), 32 << 20)))

    in_specs = [pl.BlockSpec((bm, H), lambda i: (i, 0))]                      # x tile
    in_specs += [pl.BlockSpec((bm, c.shape[1]), lambda i: (i, 0)) for c in conds]
    in_specs += [pl.BlockSpec(w.shape, lambda i: (0, 0)) for w in w_parts]    # resident W_cond rows
    in_specs += [pl.BlockSpec(w_proj.shape, lambda i: (0, 0)),                # resident W_proj
                 pl.BlockSpec(packed.shape, lambda i: (0, 0))]                # packed biases / LN affine

    return pl.pallas_call(
        make_film_kernel(len(conds), cdt),
        out_shape=jax.ShapeDtypeStruct((B, H), x.dtype),
        grid_spec=pltpu.PrefetchScalarGridSpec(
            num_scalar_prefetch=0,
            grid=grid,
            in_specs=in_specs,
            out_specs=pl.BlockSpec((bm, H), lambda i: (i, 0)),
        ),
        compiler_params=pltpu.CompilerParams(
            dimension_semantics=("parallel",),
            vmem_limit_bytes=vmem_limit,
        ),
    )(x, *conds, *w_parts, w_proj, packed)


def film_forward(x, time_embeds=None, text_embeds=None, *, prepared, bm=None):
    """Glue mirroring FilmLayer.forward.  The concat is fused into the kernel (K-split)."""
    conds = tuple(c for c in (time_embeds, text_embeds) if c is not None)
    if not conds:
        raise ValueError("Either time or text embeddings must be provided.")
    return film_layer(x, conds, prepared, bm=bm)


def reference_forward(x, time_embeds, text_embeds, params):
    """Pure-JAX reference for correctness checking (f32 math)."""
    cond = jnp.concatenate([time_embeds, text_embeds], axis=1)
    ce = cond @ params["w_cond"] + params["b_cond"]
    ce = ce * jax.nn.sigmoid(ce)
    H = x.shape[-1]
    scale, shift = ce[:, :H], ce[:, H:]
    h = x @ params["w_proj"] + params["b_proj"]
    mu = jnp.mean(h, axis=-1, keepdims=True)
    var = jnp.mean((h - mu) ** 2, axis=-1, keepdims=True)
    h = (h - mu) * jax.lax.rsqrt(var + 1e-5) * params["gamma"] + params["beta"]
    h = h * scale + shift
    h = h * jax.nn.sigmoid(h)
    return h + x


if __name__ == "__main__":
    # Small shapes consistent with the module (hidden_dim=128 -> lane-dense blocks):
    # batch=16, hidden=128, time_dim=64, text_dim=64.
    B, H, TD, XD = 16, 128, 64, 64
    Tc = TD + XD

    key = jax.random.PRNGKey(0)
    keys = jax.random.split(key, 7)

    params = {
        "w_cond": jax.random.normal(keys[0], (Tc, 2 * H), jnp.float32) * 0.1,
        "b_cond": jax.random.normal(keys[1], (2 * H,), jnp.float32) * 0.1,
        "w_proj": jax.random.normal(keys[2], (H, H), jnp.float32) * 0.1,
        "b_proj": jax.random.normal(keys[3], (H,), jnp.float32) * 0.1,
        "gamma": jnp.ones((H,), jnp.float32),
        "beta": jnp.zeros((H,), jnp.float32),
    }

    x = jax.random.normal(keys[4], (B, H), jnp.float32)
    time_embeds = jax.random.normal(keys[5], (B, TD), jnp.float32)
    text_embeds = jax.random.normal(keys[6], (B, XD), jnp.float32)

    ref = reference_forward(x, time_embeds, text_embeds, params)

    # 1) f32-weight path: B=16 -> bm=8 -> 2 grid steps; fused concat, no padding/casts.
    prep32 = prepare_film_params(params, (TD, XD), compute_dtype=jnp.float32)
    fwd32 = jax.jit(lambda a, t, s: film_forward(a, t, s, prepared=prep32))
    out = jax.block_until_ready(fwd32(x, time_embeds, text_embeds))
    assert out.shape == (B, H)
    assert jnp.allclose(out, ref, atol=5e-4, rtol=5e-4), "f32 mismatch vs JAX reference"

    # 2) Ragged batch (B=11): exercises the Pallas partial-last-block path (no host pad).
    out_tail = jax.block_until_ready(
        film_forward(x[:11], time_embeds[:11], text_embeds[:11], prepared=prep32))
    assert out_tail.shape == (11, H)
    assert jnp.allclose(out_tail, ref[:11], atol=5e-4, rtol=5e-4), "ragged-batch mismatch"

    # 3) Default bf16-weight path: f32 activations are cast per-tile in VMEM (no wrapper
    #    cast), matmuls run bf16 on the MXU with f32 accumulation, LN/SiLU stay f32.
    prep_bf = prepare_film_params(params, (TD, XD))              # compute_dtype = bfloat16
    out_bf = jax.block_until_ready(
        jax.jit(lambda a, t, s: film_forward(a, t, s, prepared=prep_bf))(
            x, time_embeds, text_embeds))
    bf = jnp.bfloat16
    params_r = dict(params)
    params_r["w_cond"] = params["w_cond"].astype(bf).astype(jnp.float32)
    params_r["w_proj"] = params["w_proj"].astype(bf).astype(jnp.float32)
    ref_bf = reference_forward(x.astype(bf).astype(jnp.float32),
                               time_embeds.astype(bf).astype(jnp.float32),
                               text_embeds.astype(bf).astype(jnp.float32),
                               params_r)
    assert out_bf.dtype == x.dtype
    assert jnp.allclose(out_bf, ref_bf, atol=2e-2, rtol=2e-2), "bf16 mismatch vs JAX reference"

    print("KERNEL_OK")
</pallas_src>

<mosaic_0001>
module attributes {stable_mosaic.version = 11 : i64} {
  func.func @film_kernel(%arg0: i32, %arg1: memref<8x128xf32, #tpu.memory_space<vmem>>, %arg2: memref<8x64xf32, #tpu.memory_space<vmem>>, %arg3: memref<8x64xf32, #tpu.memory_space<vmem>>, %arg4: memref<64x256xf32, #tpu.memory_space<vmem>>, %arg5: memref<64x256xf32, #tpu.memory_space<vmem>>, %arg6: memref<128x128xf32, #tpu.memory_space<vmem>>, %arg7: memref<8x128xf32, #tpu.memory_space<vmem>>, %arg8: memref<8x128xf32, #tpu.memory_space<vmem>>) attributes {dimension_semantics = [#tpu.dimension_semantics<parallel>], iteration_bounds = array<i64: 2>, scalar_prefetch = 0 : i64, scratch_operands = 0 : i64, tpu.core_type = #tpu.core_type<tc>, window_params = [{transform_indices = @transform_0, window_bounds = array<i64: 8, 128>}, {transform_indices = @transform_1, window_bounds = array<i64: 8, 64>}, {transform_indices = @transform_2, window_bounds = array<i64: 8, 64>}, {pipeline_mode = #tpu.pipeline_mode<synchronous>, transform_indices = @transform_3, window_bounds = array<i64: 64, 256>}, {pipeline_mode = #tpu.pipeline_mode<synchronous>, transform_indices = @transform_4, window_bounds = array<i64: 64, 256>}, {pipeline_mode = #tpu.pipeline_mode<synchronous>, transform_indices = @transform_5, window_bounds = array<i64: 128, 128>}, {pipeline_mode = #tpu.pipeline_mode<synchronous>, transform_indices = @transform_6, window_bounds = array<i64: 8, 128>}, {transform_indices = @transform_7, window_bounds = array<i64: 8, 128>}]} {
    %c0 = arith.constant 0 : index
    %c0_0 = arith.constant 0 : index
    %0 = vector.load %arg7[%c0, %c0_0] : memref<8x128xf32, #tpu.memory_space<vmem>>, vector<8x128xf32>
    %1 = vector.extract_strided_slice %0 {offsets = [0, 0], sizes = [1, 128], strides = [1, 1]} : vector<8x128xf32> to vector<1x128xf32>
    %2 = vector.extract_strided_slice %0 {offsets = [1, 0], sizes = [1, 128], strides = [1, 1]} : vector<8x128xf32> to vector<1x128xf32>
    %3 = vector.extract_strided_slice %0 {offsets = [2, 0], sizes = [1, 128], strides = [1, 1]} : vector<8x128xf32> to vector<1x128xf32>
    %4 = vector.extract_strided_slice %0 {offsets = [3, 0], sizes = [1, 128], strides = [1, 1]} : vector<8x128xf32> to vector<1x128xf32>
    %5 = vector.extract_strided_slice %0 {offsets = [4, 0], sizes = [1, 128], strides = [1, 1]} : vector<8x128xf32> to vector<1x128xf32>
    %c0_1 = arith.constant 0 : index
    %c0_2 = arith.constant 0 : index
    %6 = vector.load %arg2[%c0_1, %c0_2] : memref<8x64xf32, #tpu.memory_space<vmem>>, vector<8x64xf32>
    %c0_3 = arith.constant 0 : index
    %c0_4 = arith.constant 0 : index
    %7 = vector.load %arg4[%c0_3, %c0_4] : memref<64x256xf32, #tpu.memory_space<vmem>>, vector<64x256xf32>
    %cst = arith.constant dense<0.000000e+00> : vector<8x256xf32>
    %8 = tpu.matmul %6, %7, %cst {dimension_numbers = #tpu.dot_dimension_numbers<[1], [0], [0], [1], [0, 0, 1, 1], [], []>} : vector<8x64xf32>, vector<64x256xf32>, vector<8x256xf32> -> vector<8x256xf32>
    %c0_5 = arith.constant 0 : index
    %c0_6 = arith.constant 0 : index
    %9 = vector.load %arg3[%c0_5, %c0_6] : memref<8x64xf32, #tpu.memory_space<vmem>>, vector<8x64xf32>
    %c0_7 = arith.constant 0 : index
    %c0_8 = arith.constant 0 : index
    %10 = vector.load %arg5[%c0_7, %c0_8] : memref<64x256xf32, #tpu.memory_space<vmem>>, vector<64x256xf32>
    %cst_9 = arith.constant dense<0.000000e+00> : vector<8x256xf32>
    %11 = tpu.matmul %9, %10, %cst_9 {dimension_numbers = #tpu.dot_dimension_numbers<[1], [0], [0], [1], [0, 0, 1, 1], [], []>} : vector<8x64xf32>, vector<64x256xf32>, vector<8x256xf32> -> vector<8x256xf32>
    %12 = arith.addf %8, %11 : vector<8x256xf32>
    %13 = vector.extract_strided_slice %12 {offsets = [0, 0], sizes = [8, 128], strides = [1, 1]} : vector<8x256xf32> to vector<8x128xf32>
    %14 = vector.broadcast %1 : vector<1x128xf32> to vector<8x128xf32>
    %15 = arith.addf %13, %14 : vector<8x128xf32>
    %16 = arith.negf %15 : vector<8x128xf32>
    %17 = math.exp %16 : vector<8x128xf32>
    %cst_10 = arith.constant 1.000000e+00 : f32
    %18 = vector.broadcast %cst_10 : f32 to vector<8x128xf32>
    %19 = arith.addf %18, %17 : vector<8x128xf32>
    %20 = arith.divf %18, %19 : vector<8x128xf32>
    %21 = arith.mulf %15, %20 : vector<8x128xf32>
    %22 = vector.extract_strided_slice %12 {offsets = [0, 128], sizes = [8, 128], strides = [1, 1]} : vector<8x256xf32> to vector<8x128xf32>
    %23 = vector.broadcast %2 : vector<1x128xf32> to vector<8x128xf32>
    %24 = arith.addf %22, %23 : vector<8x128xf32>
    %25 = arith.negf %24 : vector<8x128xf32>
    %26 = math.exp %25 : vector<8x128xf32>
    %cst_11 = arith.constant 1.000000e+00 : f32
    %27 = vector.broadcast %cst_11 : f32 to vector<8x128xf32>
    %28 = arith.addf %27, %26 : vector<8x128xf32>
    %29 = arith.divf %27, %28 : vector<8x128xf32>
    %30 = arith.mulf %24, %29 : vector<8x128xf32>
    %c0_12 = arith.constant 0 : index
    %c0_13 = arith.constant 0 : index
    %31 = vector.load %arg1[%c0_12, %c0_13] : memref<8x128xf32, #tpu.memory_space<vmem>>, vector<8x128xf32>
    %c0_14 = arith.constant 0 : index
    %c0_15 = arith.constant 0 : index
    %32 = vector.load %arg6[%c0_14, %c0_15] : memref<128x128xf32, #tpu.memory_space<vmem>>, vector<128x128xf32>
    %cst_16 = arith.constant dense<0.000000e+00> : vector<8x128xf32>
    %33 = tpu.matmul %31, %32, %cst_16 {dimension_numbers = #tpu.dot_dimension_numbers<[1], [0], [0], [1], [0, 0, 1, 1], [], []>} : vector<8x128xf32>, vector<128x128xf32>, vector<8x128xf32> -> vector<8x128xf32>
    %34 = vector.broadcast %3 : vector<1x128xf32> to vector<8x128xf32>
    %35 = arith.addf %33, %34 : vector<8x128xf32>
    %cst_17 = arith.constant dense<0.000000e+00> : vector<8xf32>
    %36 = vector.multi_reduction <add>, %35, %cst_17 [1] : vector<8x128xf32> to vector<8xf32>
    %37 = vector.shape_cast %36 : vector<8xf32> to vector<8x1xf32>
    %cst_18 = arith.constant 1.280000e+02 : f32
    %38 = vector.broadcast %cst_18 : f32 to vector<8x1xf32>
    %39 = arith.divf %37, %38 : vector<8x1xf32>
    %40 = arith.mulf %35, %35 : vector<8x128xf32>
    %cst_19 = arith.constant dense<0.000000e+00> : vector<8xf32>
    %41 = vector.multi_reduction <add>, %40, %cst_19 [1] : vector<8x128xf32> to vector<8xf32>
    %42 = vector.shape_cast %41 : vector<8xf32> to vector<8x1xf32>
    %cst_20 = arith.constant 1.280000e+02 : f32
    %43 = vector.broadcast %cst_20 : f32 to vector<8x1xf32>
    %44 = arith.divf %42, %43 : vector<8x1xf32>
    %45 = arith.mulf %39, %39 : vector<8x1xf32>
    %46 = arith.subf %44, %45 : vector<8x1xf32>
    %47 = vector.broadcast %39 : vector<8x1xf32> to vector<8x128xf32>
    %48 = arith.subf %35, %47 : vector<8x128xf32>
    %cst_21 = arith.constant 9.99999974E-6 : f32
    %49 = vector.broadcast %cst_21 : f32 to vector<8x1xf32>
    %50 = arith.addf %46, %49 : vector<8x1xf32>
    %51 = math.rsqrt %50 : vector<8x1xf32>
    %52 = vector.broadcast %51 : vector<8x1xf32> to vector<8x128xf32>
    %53 = arith.mulf %48, %52 : vector<8x128xf32>
    %54 = vector.broadcast %4 : vector<1x128xf32> to vector<8x128xf32>
    %55 = arith.mulf %53, %54 : vector<8x128xf32>
    %56 = vector.broadcast %5 : vector<1x128xf32> to vector<8x128xf32>
    %57 = arith.addf %55, %56 : vector<8x128xf32>
    %58 = arith.mulf %57, %21 : vector<8x128xf32>
    %59 = arith.addf %58, %30 : vector<8x128xf32>
    %60 = arith.negf %59 : vector<8x128xf32>
    %61 = math.exp %60 : vector<8x128xf32>
    %cst_22 = arith.constant 1.000000e+00 : f32
    %62 = vector.broadcast %cst_22 : f32 to vector<8x128xf32>
    %63 = arith.addf %62, %61 : vector<8x128xf32>
    %64 = arith.divf %62, %63 : vector<8x128xf32>
    %65 = arith.mulf %59, %64 : vector<8x128xf32>
    %c0_23 = arith.constant 0 : index
    %c0_24 = arith.constant 0 : index
    %66 = vector.load %arg1[%c0_23, %c0_24] : memref<8x128xf32, #tpu.memory_space<vmem>>, vector<8x128xf32>
    %67 = arith.addf %65, %66 : vector<8x128xf32>
    %c0_25 = arith.constant 0 : index
    %c0_26 = arith.constant 0 : index
    %68 = vector.load %arg8[%c0_25, %c0_26] : memref<8x128xf32, #tpu.memory_space<vmem>>, vector<8x128xf32>
    tpu.vector_store %arg8[%c0_25, %c0_26], %67 {strides = array<i32>} : memref<8x128xf32, #tpu.memory_space<vmem>>, vector<8x128xf32>,
    return
  }
  func.func @transform_0(%arg0: i32) -> (i32, i32) {
    %c0_i32 = arith.constant 0 : i32
    %c0_i32_0 = arith.constant 0 : i32
    return %arg0, %c0_i32 : i32, i32
  }
  func.func @transform_1(%arg0: i32) -> (i32, i32) {
    %c0_i32 = arith.constant 0 : i32
    %c0_i32_0 = arith.constant 0 : i32
    return %arg0, %c0_i32 : i32, i32
  }
  func.func @transform_2(%arg0: i32) -> (i32, i32) {
    %c0_i32 = arith.constant 0 : i32
    %c0_i32_0 = arith.constant 0 : i32
    return %arg0, %c0_i32 : i32, i32
  }
  func.func @transform_3(%arg0: i32) -> (i32, i32) {
    %c0_i32 = arith.constant 0 : i32
    %c0_i32_0 = arith.constant 0 : i32
    %c0_i32_1 = arith.constant 0 : i32
    return %c0_i32, %c0_i32_0 : i32, i32
  }
  func.func @transform_4(%arg0: i32) -> (i32, i32) {
    %c0_i32 = arith.constant 0 : i32
    %c0_i32_0 = arith.constant 0 : i32
    %c0_i32_1 = arith.constant 0 : i32
    return %c0_i32, %c0_i32_0 : i32, i32
  }
  func.func @transform_5(%arg0: i32) -> (i32, i32) {
    %c0_i32 = arith.constant 0 : i32
    %c0_i32_0 = arith.constant 0 : i32
    %c0_i32_1 = arith.constant 0 : i32
    return %c0_i32, %c0_i32_0 : i32, i32
  }
  func.func @transform_6(%arg0: i32) -> (i32, i32) {
    %c0_i32 = arith.constant 0 : i32
    %c0_i32_0 = arith.constant 0 : i32
    %c0_i32_1 = arith.constant 0 : i32
    return %c0_i32, %c0_i32_0 : i32, i32
  }
  func.func @transform_7(%arg0: i32) -> (i32, i32) {
    %c0_i32 = arith.constant 0 : i32
    %c0_i32_0 = arith.constant 0 : i32
    return %arg0, %c0_i32 : i32, i32
  }
}

</mosaic_0001>

<llo_original>
// kernel: _lambda_.1
$region0: #{_lambda_.1}
  #allocation0 [shape = 'u32[]', space=smem, size = 0x4, offset = 0x4, fixed_abs, tag = 'smem constant byte address 0x4 - core index']
  #allocation1 [shape = 'u32[144,128]{1,0:T(1,128)}', space=vmem, size = 0x12000, scoped, tag = 'internal scratch']
  %s0 = inlined_call_operand.hbm [shape: f32[16,128], index: 0, kind: input, shape index: {}]
  %s1 = inlined_call_operand.hbm [shape: f32[16,64], index: 1, kind: input, shape index: {}]
  %s2 = inlined_call_operand.hbm [shape: f32[16,64], index: 2, kind: input, shape index: {}]
  %s3 = inlined_call_operand.hbm [shape: f32[64,256], index: 3, kind: input, shape index: {}]
  %s4 = inlined_call_operand.hbm [shape: f32[64,256], index: 4, kind: input, shape index: {}]
  %s5 = inlined_call_operand.hbm [shape: f32[128,128], index: 5, kind: input, shape index: {}]
  %s6 = inlined_call_operand.vmem [shape: f32[8,128], index: 6, kind: input, shape index: {}]
  %s7 = inlined_call_operand.hbm [shape: f32[16,128], index: 7, kind: output, shape index: {}]
  %s8 = sld [smem:[#allocation0]]
  $region85: #{_lambda_.1} parent=0
    _
  %s10 = ssub.s32 1, %s8
  %s11 = scalar_select 0, %s10, %s8
  $region1: #{_lambda_.1} parent=0
    #allocation2 [shape = 'u8[8192]{0}', space=vmem, size = 0x2000, scoped, tag = 'input window, operand 0']
    #allocation3 [shape = 's32[2]{0}', space=sflag, size = 0x8, scoped, tag = 'scoped memory for _lambda_.1']
    #allocation4 [shape = 's32[2]{0}', space=sflag, size = 0x8, scoped, tag = 'scoped memory for _lambda_.1']
    #allocation5 [shape = 'u8[8192]{0}', space=vmem, size = 0x2000, scoped, tag = 'input window, operand 1']
    #allocation6 [shape = 's32[2]{0}', space=sflag, size = 0x8, scoped, tag = 'scoped memory for _lambda_.1']
    #allocation7 [shape = 'u8[8192]{0}', space=vmem, size = 0x2000, scoped, tag = 'input window, operand 2']
    #allocation8 [shape = 'u8[65536]{0}', space=vmem, size = 0x10000, scoped, tag = 'input window, operand 3, single buffered']
    #allocation9 [shape = 's32[1]{0}', space=sflag, size = 0x4, scoped, tag = 'scoped memory for _lambda_.1']
    #allocation10 [shape = 'u8[65536]{0}', space=vmem, size = 0x10000, scoped, tag = 'input window, operand 4, single buffered']
    #allocation11 [shape = 'u8[65536]{0}', space=vmem, size = 0x10000, scoped, tag = 'input window, operand 5, single buffered']
    #allocation12 [shape = 's32[1]{0}', space=sflag, size = 0x4, scoped, tag = 'scoped memory for _lambda_.1']
    #allocation13 [shape = 'u8[8192]{0}', space=vmem, size = 0x2000, scoped, tag = 'output window, operand 0']
    %12 = vsyncpa [#allocation3], 0
    %s13 = scalar_lea.sflag [#allocation3], 1
    %14 = vsyncpa %s13, 0
    %15 = vsyncpa [#allocation6], 0
    %s16 = scalar_lea.sflag [#allocation6], 1
    %17 = vsyncpa %s16, 0
    %18 = vsyncpa [#allocation9], 0
    %19 = vsyncpa [#allocation12], 0
    %20 = vsyncpa [#allocation4], 0
    %s21 = scalar_lea.sflag [#allocation4], 1
    %22 = vsyncpa %s21, 0
    loop: start=0, step=1, limit=4
    $region2: #{_lambda_.1} parent=1 // loop_pre_header
      _
    $region3: #{_lambda_.1} parent=1 // loop_header
      %s24 = sphi 0, %s28
      %p25 = scmp.ge.s32.totalorder %s24, 4
      %s34 = sphi 0, %s36
      %s37 = sphi 0, %s34
      %s38 = sphi 0, %s37
      %s54 = sphi 0, %s38
      %s60 = sphi 0, %s62
      %s63 = sphi 0, %s60
      %s64 = sphi 0, %s63
      %s80 = sphi 0, %s64
      %s86 = sphi 0, %s88
      %s89 = sphi 0, %s86
      %s90 = sphi 0, %s89
      %s106 = sphi 0, %s90
      %s110 = sphi 0, %s110
      %s112 = sphi 0, %s110
      %s113 = sphi 0, %s112
      %s127 = sphi 0, %s113
      %s131 = sphi 0, %s131
      %s133 = sphi 0, %s131
      %s134 = sphi 0, %s133
      %s148 = sphi 0, %s134
      %s152 = sphi 0, %s152
      %s154 = sphi 0, %s152
      %s155 = sphi 0, %s154
      %s169 = sphi 0, %s155
      %s173 = sphi 0, %s173
      %s175 = sphi 0, %s173
      %s176 = sphi 0, %s175
      %s190 = sphi 0, %s176
      %s196 = sphi 0, %s198
      %s199 = sphi 0, %s196
      %s200 = sphi 0, %s199
      %s216 = sphi 0, %s200
    $region4: #{_lambda_.1} parent=1 // loop_header_branch
      %27 = sbr.rel (%p25) target = $region8
    $region5: #{_lambda_.1} parent=1 // loop_body
      %s29 = ssub.s32 %s24, 1
      %s30 = ssub.s32 %s24, 2
      %s31 = sadd.s32 %s24, 1
      %s32 = ssub.s32 %s24, %s31
      %p33 = scmp.eq.s32.totalorder %s32, 0
      %s35 = sadd.s32 %s34, 1
      %s36 = scalar_select %p33, %s34, %s35
      %p39 = pneg %p33
      %p40 = scmp.eq.s32.totalorder %s24, 1
      %p41 = por %p39, %p40
      %p42 = scmp.ne.s32.totalorder %s34, %s37
      %p43 = scmp.eq.s32.totalorder %s24, 0
      %p44 = por %p42, %p43
      %p45 = scmp.ne.s32.totalorder %s34, %s37
      %p46 = scmp.eq.s32.totalorder %s29, 1
      %p47 = por %p45, %p46
      %p48 = scmp.ne.s32.totalorder %s37, %s38
      %p49 = scmp.eq.s32.totalorder %s29, 0
      %p50 = por %p48, %p49
      %p51 = scmp.ne.s32.totalorder %s37, %s38
      %p52 = scmp.eq.s32.totalorder %s30, 1
      %p53 = por %p51, %p52
      %p55 = scmp.ne.s32.totalorder %s38, %s54
      %p56 = scmp.eq.s32.totalorder %s30, 0
      %p57 = por %p55, %p56
      %s58 = ssub.s32 %s24, %s31
      %p59 = scmp.eq.s32.totalorder %s58, 0
      %s61 = sadd.s32 %s60, 1
      %s62 = scalar_select %p59, %s60, %s61
      %p65 = pneg %p59
      %p66 = scmp.eq.s32.totalorder %s24, 1
      %p67 = por %p65, %p66
      %p68 = scmp.ne.s32.totalorder %s60, %s63
      %p69 = scmp.eq.s32.totalorder %s24, 0
      %p70 = por %p68, %p69
      %p71 = scmp.ne.s32.totalorder %s60, %s63
      %p72 = scmp.eq.s32.totalorder %s29, 1
      %p73 = por %p71, %p72
      %p74 = scmp.ne.s32.totalorder %s63, %s64
      %p75 = scmp.eq.s32.totalorder %s29, 0
      %p76 = por %p74, %p75
      %p77 = scmp.ne.s32.totalorder %s63, %s64
      %p78 = scmp.eq.s32.totalorder %s30, 1
      %p79 = por %p77, %p78
      %p81 = scmp.ne.s32.totalorder %s64, %s80
      %p82 = scmp.eq.s32.totalorder %s30, 0
      %p83 = por %p81, %p82
      %s84 = ssub.s32 %s24, %s31
      %p85 = scmp.eq.s32.totalorder %s84, 0
      %s87 = sadd.s32 %s86, 1
      %s88 = scalar_select %p85, %s86, %s87
      %p91 = pneg %p85
      %p92 = scmp.eq.s32.totalorder %s24, 1
      %p93 = por %p91, %p92
      %p94 = scmp.ne.s32.totalorder %s86, %s89
      %p95 = scmp.eq.s32.totalorder %s24, 0
      %p96 = por %p94, %p95
      %p97 = scmp.ne.s32.totalorder %s86, %s89
      %p98 = scmp.eq.s32.totalorder %s29, 1
      %p99 = por %p97, %p98
      %p100 = scmp.ne.s32.totalorder %s89, %s90
      %p101 = scmp.eq.s32.totalorder %s29, 0
      %p102 = por %p100, %p101
      %p103 = scmp.ne.s32.totalorder %s89, %s90
      %p104 = scmp.eq.s32.totalorder %s30, 1
      %p105 = por %p103, %p104
      %p107 = scmp.ne.s32.totalorder %s90, %s106
      %p108 = scmp.eq.s32.totalorder %s30, 0
      %p109 = por %p107, %p108
      %s111 = sadd.s32 %s110, 1
      %p114 = scmp.eq.s32.totalorder %s24, 1
      %p115 = scmp.ne.s32.totalorder %s110, %s112
      %p116 = scmp.eq.s32.totalorder %s24, 0
      %p117 = por %p115, %p116
      %p118 = scmp.ne.s32.totalorder %s110, %s112
      %p119 = scmp.eq.s32.totalorder %s29, 1
      %p120 = por %p118, %p119
      %p121 = scmp.ne.s32.totalorder %s112, %s113
      %p122 = scmp.eq.s32.totalorder %s29, 0
      %p123 = por %p121, %p122
      %p124 = scmp.ne.s32.totalorder %s112, %s113
      %p125 = scmp.eq.s32.totalorder %s30, 1
      %p126 = por %p124, %p125
      %p128 = scmp.ne.s32.totalorder %s113, %s127
      %p129 = scmp.eq.s32.totalorder %s30, 0
      %p130 = por %p128, %p129
      %s132 = sadd.s32 %s131, 1
      %p135 = scmp.eq.s32.totalorder %s24, 1
      %p136 = scmp.ne.s32.totalorder %s131, %s133
      %p137 = scmp.eq.s32.totalorder %s24, 0
      %p138 = por %p136, %p137
      %p139 = scmp.ne.s32.totalorder %s131, %s133
      %p140 = scmp.eq.s32.totalorder %s29, 1
      %p141 = por %p139, %p140
      %p142 = scmp.ne.s32.totalorder %s133, %s134
      %p143 = scmp.eq.s32.totalorder %s29, 0
      %p144 = por %p142, %p143
      %p145 = scmp.ne.s32.totalorder %s133, %s134
      %p146 = scmp.eq.s32.totalorder %s30, 1
      %p147 = por %p145, %p146
      %p149 = scmp.ne.s32.totalorder %s134, %s148
      %p150 = scmp.eq.s32.totalorder %s30, 0
      %p151 = por %p149, %p150
      %s153 = sadd.s32 %s152, 1
      %p156 = scmp.eq.s32.totalorder %s24, 1
      %p157 = scmp.ne.s32.totalorder %s152, %s154
      %p158 = scmp.eq.s32.totalorder %s24, 0
      %p159 = por %p157, %p158
      %p160 = scmp.ne.s32.totalorder %s152, %s154
      %p161 = scmp.eq.s32.totalorder %s29, 1
      %p162 = por %p160, %p161
      %p163 = scmp.ne.s32.totalorder %s154, %s155
      %p164 = scmp.eq.s32.totalorder %s29, 0
      %p165 = por %p163, %p164
      %p166 = scmp.ne.s32.totalorder %s154, %s155
      %p167 = scmp.eq.s32.totalorder %s30, 1
      %p168 = por %p166, %p167
      %p170 = scmp.ne.s32.totalorder %s155, %s169
      %p171 = scmp.eq.s32.totalorder %s30, 0
      %p172 = por %p170, %p171
      %s174 = sadd.s32 %s173, 1
      %p177 = scmp.eq.s32.totalorder %s24, 1
      %p178 = scmp.ne.s32.totalorder %s173, %s175
      %p179 = scmp.eq.s32.totalorder %s24, 0
      %p180 = por %p178, %p179
      %p181 = scmp.ne.s32.totalorder %s173, %s175
      %p182 = scmp.eq.s32.totalorder %s29, 1
      %p183 = por %p181, %p182
      %p184 = scmp.ne.s32.totalorder %s175, %s176
      %p185 = scmp.eq.s32.totalorder %s29, 0
      %p186 = por %p184, %p185
      %p187 = scmp.ne.s32.totalorder %s175, %s176
      %p188 = scmp.eq.s32.totalorder %s30, 1
      %p189 = por %p187, %p188
      %p191 = scmp.ne.s32.totalorder %s176, %s190
      %p192 = scmp.eq.s32.totalorder %s30, 0
      %p193 = por %p191, %p192
      %s194 = ssub.s32 %s24, %s31
      %p195 = scmp.eq.s32.totalorder %s194, 0
      %s197 = sadd.s32 %s196, 1
      %s198 = scalar_select %p195, %s196, %s197
      %p201 = pneg %p195
      %p202 = scmp.eq.s32.totalorder %s24, 1
      %p203 = por %p201, %p202
      %p204 = scmp.ne.s32.totalorder %s196, %s199
      %p205 = scmp.eq.s32.totalorder %s24, 0
      %p206 = por %p204, %p205
      %p207 = scmp.ne.s32.totalorder %s196, %s199
      %p208 = scmp.eq.s32.totalorder %s29, 1
      %p209 = por %p207, %p208
      %p210 = scmp.ne.s32.totalorder %s199, %s200
      %p211 = scmp.eq.s32.totalorder %s29, 0
      %p212 = por %p210, %p211
      %p213 = scmp.ne.s32.totalorder %s199, %s200
      %p214 = scmp.eq.s32.totalorder %s30, 1
      %p215 = por %p213, %p214
      %p217 = scmp.ne.s32.totalorder %s200, %s216
      %p218 = scmp.eq.s32.totalorder %s30, 0
      %p219 = por %p217, %p218
      %p220 = scmp.le.s32.totalorder 1, %s24
      %p221 = scmp.lt.s32.totalorder %s24, 3
      %p222 = pnand %p220, %p221
      %p223 = pneg %p222
      // Predicated region
      $region9: #{_lambda_.1} parent=5 // pred_check
        _
      $region10: #{_lambda_.1} parent=5 // pred_check_branch
        %225 = sbr.rel (%p222) target = $region12
      $region11: #{_lambda_.1} parent=5 // pred_region
        %s226 = ssub.s32 %s24, 1
        // Predicated region
        $region13: #{_lambda_.1} parent=11 // pred_check
          %p227 = pneg %p123
        $region14: #{_lambda_.1} parent=11 // pred_check_branch
          %229 = sbr.rel (%p227) target = $region16
        $region15: #{_lambda_.1} parent=11 // pred_region
          %s231 = ssub.s32 2048, 2048
          %232 = vsyncadd [#allocation9], %s231
          %s233 = sshll.u32 [#allocation8], 4
          %s234 = int_to_ptr.vmem [resolvable:$true] %s233
          %239 = dma.hbm_to_vmem [thread:$0]  %s3, 2048, %s234, [#allocation9], 256, 256, 16
        $region16: #{_lambda_.1} parent=11 // pred_fallthru
          _
        // Predicated region
        $region17: #{_lambda_.1} parent=11 // pred_check
          %p240 = pneg %p144
        $region18: #{_lambda_.1} parent=11 // pred_check_branch
          %242 = sbr.rel (%p240) target = $region20
        $region19: #{_lambda_.1} parent=11 // pred_region
          %s244 = ssub.s32 2048, 2048
          %245 = vsyncadd [#allocation9], %s244
          %s246 = sshll.u32 [#allocation10], 4
          %s247 = int_to_ptr.vmem [resolvable:$true] %s246
          %252 = dma.hbm_to_vmem [thread:$0]  %s4, 2048, %s247, [#allocation9], 256, 256, 16
        $region20: #{_lambda_.1} parent=11 // pred_fallthru
          _
        // Predicated region
        $region21: #{_lambda_.1} parent=11 // pred_check
          %p253 = pneg %p165
        $region22: #{_lambda_.1} parent=11 // pred_check_branch
          %255 = sbr.rel (%p253) target = $region24
        $region23: #{_lambda_.1} parent=11 // pred_region
          %s257 = ssub.s32 2048, 2048
          %258 = vsyncadd [#allocation12], %s257
          %s259 = sshll.u32 [#allocation11], 4
          %s260 = int_to_ptr.vmem [resolvable:$true] %s259
          %265 = dma.hbm_to_vmem [thread:$0]  %s5, 2048, %s260, [#allocation12], 128, 128, 8
        $region24: #{_lambda_.1} parent=11 // pred_fallthru
          _
        // Predicated region
        $region25: #{_lambda_.1} parent=11 // pred_check
          %p266 = pneg %p186
        $region26: #{_lambda_.1} parent=11 // pred_check_branch
          %268 = sbr.rel (%p266) target = $region28
        $region27: #{_lambda_.1} parent=11 // pred_region
          _
        $region28: #{_lambda_.1} parent=11 // pred_fallthru
          _
      $region12: #{_lambda_.1} parent=5 // pred_fallthru
        _
      %p269 = scmp.lt.s32.totalorder %s24, 2
      // Predicated region
      $region29: #{_lambda_.1} parent=5 // pred_check
        %p270 = pneg %p269
      $region30: #{_lambda_.1} parent=5 // pred_check_branch
        %272 = sbr.rel (%p270) target = $region32
      $region31: #{_lambda_.1} parent=5 // pred_region
        // Predicated region
        $region33: #{_lambda_.1} parent=31 // pred_check
          %p273 = pneg %p44
        $region34: #{_lambda_.1} parent=31 // pred_check_branch
          %275 = sbr.rel (%p273) target = $region36
        $region35: #{_lambda_.1} parent=31 // pred_region
          %s276 = sand.u32 %s34, 1
          %s277 = scalar_lea.sflag [#allocation3], %s276
          %s278 = sand.u32 %s34, 1
          %s279 = smul.addr %s278, 8
          %s280 = scalar_lea.vmem [#allocation2], %s279
          %s282 = ssub.s32 128, 128
          %283 = vsyncadd %s277, %s282
          %s284 = smul.addr %s24, 128
          %s285 = scalar_lea.hbm %s0, %s284
          %s287 = sshll.u32 %s280, 4
          %s288 = int_to_ptr.vmem [resolvable:$true] %s287
          %290 = dma.hbm_to_vmem [thread:$0]  %s285, 128, %s288, %s277
        $region36: #{_lambda_.1} parent=31 // pred_fallthru
          _
        // Predicated region
        $region37: #{_lambda_.1} parent=31 // pred_check
          %p291 = pneg %p70
        $region38: #{_lambda_.1} parent=31 // pred_check_branch
          %293 = sbr.rel (%p291) target = $region40
        $region39: #{_lambda_.1} parent=31 // pred_region
          %s294 = sand.u32 %s24, 1
          %s295 = scalar_lea.sflag [#allocation6], %s294
          %s296 = sand.u32 %s60, 1
          %s297 = smul.addr %s296, 8
          %s298 = scalar_lea.vmem [#allocation5], %s297
          %s300 = ssub.s32 128, 128
          %301 = vsyncadd %s295, %s300
          %s302 = smul.addr %s24, 128
          %s303 = scalar_lea.hbm %s1, %s302
          %s305 = sshll.u32 %s298, 4
          %s306 = int_to_ptr.vmem [resolvable:$true] %s305
          %308 = dma.hbm_to_vmem [thread:$0]  %s303, 128, %s306, %s295
        $region40: #{_lambda_.1} parent=31 // pred_fallthru
          _
        // Predicated region
        $region41: #{_lambda_.1} parent=31 // pred_check
          %p309 = pneg %p96
        $region42: #{_lambda_.1} parent=31 // pred_check_branch
          %311 = sbr.rel (%p309) target = $region44
        $region43: #{_lambda_.1} parent=31 // pred_region
          %s312 = sand.u32 %s24, 1
          %s313 = scalar_lea.sflag [#allocation6], %s312
          %s314 = sand.u32 %s86, 1
          %s315 = smul.addr %s314, 8
          %s316 = scalar_lea.vmem [#allocation7], %s315
          %s318 = ssub.s32 128, 128
          %319 = vsyncadd %s313, %s318
          %s320 = smul.addr %s24, 128
          %s321 = scalar_lea.hbm %s2, %s320
          %s323 = sshll.u32 %s316, 4
          %s324 = int_to_ptr.vmem [resolvable:$true] %s323
          %326 = dma.hbm_to_vmem [thread:$0]  %s321, 128, %s324, %s313
        $region44: #{_lambda_.1} parent=31 // pred_fallthru
          _
      $region32: #{_lambda_.1} parent=5 // pred_fallthru
        _
      %p327 = scmp.le.s32.totalorder 1, %s24
      %p328 = scmp.lt.s32.totalorder %s24, 3
      %p329 = pnand %p327, %p328
      %p330 = pneg %p329
      // Predicated region
      $region45: #{_lambda_.1} parent=5 // pred_check
        _
      $region46: #{_lambda_.1} parent=5 // pred_check_branch
        %332 = sbr.rel (%p329) target = $region48
      $region47: #{_lambda_.1} parent=5 // pred_region
        %s333 = ssub.s32 %s24, 1
        %s334 = sand.u32 %s37, 1
        %s335 = scalar_lea.sflag [#allocation3], %s334
        %s336 = sand.u32 %s37, 1
        %s337 = smul.addr %s336, 8
        %s338 = scalar_lea.vmem [#allocation2], %s337
        // Predicated region
        $region49: #{_lambda_.1} parent=47 // pred_check
          %p339 = pneg %p50
        $region50: #{_lambda_.1} parent=47 // pred_check_branch
          %341 = sbr.rel (%p339) target = $region52
        $region51: #{_lambda_.1} parent=47 // pred_region
          %342 = dma.done %s335, 128
        $region52: #{_lambda_.1} parent=47 // pred_fallthru
          _
        %s343 = sand.u32 %s29, 1
        %s344 = scalar_lea.sflag [#allocation6], %s343
        %s345 = sand.u32 %s63, 1
        %s346 = smul.addr %s345, 8
        %s347 = scalar_lea.vmem [#allocation5], %s346
        // Predicated region
        $region53: #{_lambda_.1} parent=47 // pred_check
          %p348 = pneg %p76
        $region54: #{_lambda_.1} parent=47 // pred_check_branch
          %350 = sbr.rel (%p348) target = $region56
        $region55: #{_lambda_.1} parent=47 // pred_region
          %351 = dma.done %s344, 128
        $region56: #{_lambda_.1} parent=47 // pred_fallthru
          _
        %s352 = sand.u32 %s29, 1
        %s353 = scalar_lea.sflag [#allocation6], %s352
        %s354 = sand.u32 %s89, 1
        %s355 = smul.addr %s354, 8
        %s356 = scalar_lea.vmem [#allocation7], %s355
        // Predicated region
        $region57: #{_lambda_.1} parent=47 // pred_check
          %p357 = pneg %p102
        $region58: #{_lambda_.1} parent=47 // pred_check_branch
          %359 = sbr.rel (%p357) target = $region60
        $region59: #{_lambda_.1} parent=47 // pred_region
          %360 = dma.done %s353, 128
        $region60: #{_lambda_.1} parent=47 // pred_fallthru
          _
        // Predicated region
        $region61: #{_lambda_.1} parent=47 // pred_check
          %p361 = pneg %p123
        $region62: #{_lambda_.1} parent=47 // pred_check_branch
          %363 = sbr.rel (%p361) target = $region64
        $region63: #{_lambda_.1} parent=47 // pred_region
          %364 = dma.done [#allocation9], 2048
        $region64: #{_lambda_.1} parent=47 // pred_fallthru
          _
        // Predicated region
        $region65: #{_lambda_.1} parent=47 // pred_check
          %p365 = pneg %p144
        $region66: #{_lambda_.1} parent=47 // pred_check_branch
          %367 = sbr.rel (%p365) target = $region68
        $region67: #{_lambda_.1} parent=47 // pred_region
          %368 = dma.done [#allocation9], 2048
        $region68: #{_lambda_.1} parent=47 // pred_fallthru
          _
        // Predicated region
        $region69: #{_lambda_.1} parent=47 // pred_check
          %p369 = pneg %p165
        $region70: #{_lambda_.1} parent=47 // pred_check_branch
          %371 = sbr.rel (%p369) target = $region72
        $region71: #{_lambda_.1} parent=47 // pred_region
          %372 = dma.done [#allocation12], 2048
        $region72: #{_lambda_.1} parent=47 // pred_fallthru
          _
        %s373 = sand.u32 %s37, 1
        %s374 = scalar_lea.sflag [#allocation3], %s373
        %s375 = sand.u32 %s37, 1
        %s376 = smul.addr %s375, 8
        %s377 = scalar_lea.vmem [#allocation2], %s376
        %p378 = pneg %p50
        %p379 = pneg %p47
        %s380 = sand.u32 %s29, 1
        %s381 = scalar_lea.sflag [#allocation6], %s380
        %s382 = sand.u32 %s63, 1
        %s383 = smul.addr %s382, 8
        %s384 = scalar_lea.vmem [#allocation5], %s383
        %p385 = pneg %p76
        %p386 = pneg %p73
        %s387 = sand.u32 %s29, 1
        %s388 = scalar_lea.sflag [#allocation6], %s387
        %s389 = sand.u32 %s89, 1
        %s390 = smul.addr %s389, 8
        %s391 = scalar_lea.vmem [#allocation7], %s390
        %p392 = pneg %p102
        %p393 = pneg %p99
        %p394 = pneg %p123
        %p395 = pneg %p120
        %p396 = pneg %p144
        %p397 = pneg %p141
        %p398 = pneg %p165
        %p399 = pneg %p162
        %p400 = pneg %p186
        %p401 = pneg %p183
        %p402 = pneg %p212
        %p403 = pneg %p209
        %s404 = sand.u32 %s199, 1
        %s405 = scalar_lea.sflag [#allocation4], %s404
        %s406 = sand.u32 %s199, 1
        %s407 = smul.addr %s406, 8
        %s408 = scalar_lea.vmem [#allocation13], %s407
        %v409 = vld [vmem:[%s6] sm:$0xff]
        %v410 = vld [vmem:[%s347] sm:$0xff]
        %v411 = vld [vmem:[#allocation8] sm:$0xff]
        %v412 = vld [vmem:[#allocation8 + $0x8] sm:$0xff]
        %v413 = vld [vmem:[#allocation8 + $0x10] sm:$0xff]
        %v414 = vld [vmem:[#allocation8 + $0x18] sm:$0xff]
        %v415 = vld [vmem:[#allocation8 + $0x20] sm:$0xff]
        %v416 = vld [vmem:[#allocation8 + $0x28] sm:$0xff]
        %v417 = vld [vmem:[#allocation8 + $0x30] sm:$0xff]
        %v418 = vld [vmem:[#allocation8 + $0x38] sm:$0xff]
        %v419 = vld [vmem:[#allocation8 + $0x40] sm:$0xff]
        %v420 = vld [vmem:[#allocation8 + $0x48] sm:$0xff]
        %v421 = vld [vmem:[#allocation8 + $0x50] sm:$0xff]
        %v422 = vld [vmem:[#allocation8 + $0x58] sm:$0xff]
        %v423 = vld [vmem:[#allocation8 + $0x60] sm:$0xff]
        %v424 = vld [vmem:[#allocation8 + $0x68] sm:$0xff]
        %v425 = vld [vmem:[#allocation8 + $0x70] sm:$0xff]
        %v426 = vld [vmem:[#allocation8 + $0x78] sm:$0xff]
        %v427 = vld [vmem:[%s356] sm:$0xff]
        %v428 = vld [vmem:[#allocation10] sm:$0xff]
        %v429 = vld [vmem:[#allocation10 + $0x8] sm:$0xff]
        %v430 = vld [vmem:[#allocation10 + $0x10] sm:$0xff]
        %v431 = vld [vmem:[#allocation10 + $0x18] sm:$0xff]
        %v432 = vld [vmem:[#allocation10 + $0x20] sm:$0xff]
        %v433 = vld [vmem:[#allocation10 + $0x28] sm:$0xff]
        %v434 = vld [vmem:[#allocation10 + $0x30] sm:$0xff]
        %v435 = vld [vmem:[#allocation10 + $0x38] sm:$0xff]
        %v436 = vld [vmem:[#allocation10 + $0x40] sm:$0xff]
        %v437 = vld [vmem:[#allocation10 + $0x48] sm:$0xff]
        %v438 = vld [vmem:[#allocation10 + $0x50] sm:$0xff]
        %v439 = vld [vmem:[#allocation10 + $0x58] sm:$0xff]
        %v440 = vld [vmem:[#allocation10 + $0x60] sm:$0xff]
        %v441 = vld [vmem:[#allocation10 + $0x68] sm:$0xff]
        %v442 = vld [vmem:[#allocation10 + $0x70] sm:$0xff]
        %v443 = vld [vmem:[#allocation10 + $0x78] sm:$0xff]
        %vm444 = vcmask 523264
        %v446 = vsel %vm444, %v427, 0
        %448 = vmatprep.subr.mxu0 %v429
        %449 = vmatpush1.msra.mxu0 %v428
        %450 = vmatprep.subr.mxu0 %v431
        %451 = vmatpush1.msra.mxu0 %v430
        %452 = vmatprep.subr.mxu0 %v433
        %453 = vmatpush1.msra.mxu0 %v432
        %454 = vmatprep.subr.mxu0 %v435
        %455 = vmatpush1.msra.mxu0 %v434
        %456 = vmatprep.subr.mxu0 %v437
        %457 = vmatpush1.msra.mxu0 %v436
        %458 = vmatprep.subr.mxu0 %v439
        %459 = vmatpush1.msra.mxu0 %v438
        %460 = vmatprep.subr.mxu0 %v441
        %461 = vmatpush1.msra.mxu0 %v440
        %462 = vmatprep.subr.mxu0 %v443
        %463 = vmatpush1.msra.mxu0 %v442
        %464 = vmatprep.subr.mxu0 0.0
        %465 = vmatpush1.msra.mxu0 0.0
        %466 = vmatprep.subr.mxu0 0.0
        %467 = vmatpush1.msra.mxu0 0.0
        %468 = vmatprep.subr.mxu0 0.0
        %469 = vmatpush1.msra.mxu0 0.0
        %470 = vmatprep.subr.mxu0 0.0
        %471 = vmatpush1.msra.mxu0 0.0
        %472 = vmatprep.subr.mxu0 0.0
        %473 = vmatpush1.msra.mxu0 0.0
        %474 = vmatprep.subr.mxu0 0.0
        %475 = vmatpush1.msra.mxu0 0.0
        %476 = vmatprep.subr.mxu0 0.0
        %477 = vmatpush1.msra.mxu0 0.0
        %478 = vmatprep.subr.mxu0 0.0
        %479 = vmatpush1.msra.mxu0 0.0
        %480 = vmatprep.subr.mxu0 0.0
        %481 = vmatpush1.msra.mxu0 0.0
        %482 = vmatprep.subr.mxu0 0.0
        %483 = vmatpush1.msra.mxu0 0.0
        %484 = vmatprep.subr.mxu0 0.0
        %485 = vmatpush1.msra.mxu0 0.0
        %486 = vmatprep.subr.mxu0 0.0
        %487 = vmatpush1.msra.mxu0 0.0
        %488 = vmatprep.subr.mxu0 0.0
        %489 = vmatpush1.msra.mxu0 0.0
        %490 = vmatprep.subr.mxu0 0.0
        %491 = vmatpush1.msra.mxu0 0.0
        %492 = vmatprep.subr.mxu0 0.0
        %493 = vmatpush1.msra.mxu0 0.0
        %494 = vmatprep.subr.mxu0 0.0
        %495 = vmatpush1.msra.mxu0 0.0
        %496 = vmatprep.subr.mxu0 0.0
        %497 = vmatpush1.msra.mxu0 0.0
        %498 = vmatprep.subr.mxu0 0.0
        %499 = vmatpush1.msra.mxu0 0.0
        %500 = vmatprep.subr.mxu0 0.0
        %501 = vmatpush1.msra.mxu0 0.0
        %502 = vmatprep.subr.mxu0 0.0
        %503 = vmatpush1.msra.mxu0 0.0
        %504 = vmatprep.subr.mxu0 0.0
        %505 = vmatpush1.msra.mxu0 0.0
        %506 = vmatprep.subr.mxu0 0.0
        %507 = vmatpush1.msra.mxu0 0.0
        %508 = vmatprep.subr.mxu0 0.0
        %509 = vmatpush1.msra.mxu0 0.0
        %510 = vmatprep.subr.mxu0 0.0
        %511 = vmatpush1.msra.mxu0 0.0
        %512 = vmatprep.mubr.f32.mxu0 0.0
        %513 = vmatmul.mubr.f32.gmra.mrb[0].mxu0 %v446
        %v514 = vpop.f32.mrb[0].mxu0
        %v515 = vadd.f32 0.0, %v514
        %v516 = vpop.f32.mrb[0].mxu0
        %v517 = vadd.f32 0.0, %v516
        %518 = vdwg.mxu0
        %v520 = vsel %vm444, %v410, 0
        %522 = vmatprep.subr.mxu0 %v412
        %523 = vmatpush1.msra.mxu0 %v411
        %524 = vmatprep.subr.mxu0 %v414
        %525 = vmatpush1.msra.mxu0 %v413
        %526 = vmatprep.subr.mxu0 %v416
        %527 = vmatpush1.msra.mxu0 %v415
        %528 = vmatprep.subr.mxu0 %v418
        %529 = vmatpush1.msra.mxu0 %v417
        %530 = vmatprep.subr.mxu0 %v420
        %531 = vmatpush1.msra.mxu0 %v419
        %532 = vmatprep.subr.mxu0 %v422
        %533 = vmatpush1.msra.mxu0 %v421
        %534 = vmatprep.subr.mxu0 %v424
        %535 = vmatpush1.msra.mxu0 %v423
        %536 = vmatprep.subr.mxu0 %v426
        %537 = vmatpush1.msra.mxu0 %v425
        %538 = vmatprep.subr.mxu0 0.0
        %539 = vmatpush1.msra.mxu0 0.0
        %540 = vmatprep.subr.mxu0 0.0
        %541 = vmatpush1.msra.mxu0 0.0
        %542 = vmatprep.subr.mxu0 0.0
        %543 = vmatpush1.msra.mxu0 0.0
        %544 = vmatprep.subr.mxu0 0.0
        %545 = vmatpush1.msra.mxu0 0.0
        %546 = vmatprep.subr.mxu0 0.0
        %547 = vmatpush1.msra.mxu0 0.0
        %548 = vmatprep.subr.mxu0 0.0
        %549 = vmatpush1.msra.mxu0 0.0
        %550 = vmatprep.subr.mxu0 0.0
        %551 = vmatpush1.msra.mxu0 0.0
        %552 = vmatprep.subr.mxu0 0.0
        %553 = vmatpush1.msra.mxu0 0.0
        %554 = vmatprep.subr.mxu0 0.0
        %555 = vmatpush1.msra.mxu0 0.0
        %556 = vmatprep.subr.mxu0 0.0
        %557 = vmatpush1.msra.mxu0 0.0
        %558 = vmatprep.subr.mxu0 0.0
        %559 = vmatpush1.msra.mxu0 0.0
        %560 = vmatprep.subr.mxu0 0.0
        %561 = vmatpush1.msra.mxu0 0.0
        %562 = vmatprep.subr.mxu0 0.0
        %563 = vmatpush1.msra.mxu0 0.0
        %564 = vmatprep.subr.mxu0 0.0
        %565 = vmatpush1.msra.mxu0 0.0
        %566 = vmatprep.subr.mxu0 0.0
        %567 = vmatpush1.msra.mxu0 0.0
        %568 = vmatprep.subr.mxu0 0.0
        %569 = vmatpush1.msra.mxu0 0.0
        %570 = vmatprep.subr.mxu0 0.0
        %571 = vmatpush1.msra.mxu0 0.0
        %572 = vmatprep.subr.mxu0 0.0
        %573 = vmatpush1.msra.mxu0 0.0
        %574 = vmatprep.subr.mxu0 0.0
        %575 = vmatpush1.msra.mxu0 0.0
        %576 = vmatprep.subr.mxu0 0.0
        %577 = vmatpush1.msra.mxu0 0.0
        %578 = vmatprep.subr.mxu0 0.0
        %579 = vmatpush1.msra.mxu0 0.0
        %580 = vmatprep.subr.mxu0 0.0
        %581 = vmatpush1.msra.mxu0 0.0
        %582 = vmatprep.subr.mxu0 0.0
        %583 = vmatpush1.msra.mxu0 0.0
        %584 = vmatprep.subr.mxu0 0.0
        %585 = vmatpush1.msra.mxu0 0.0
        %586 = vmatprep.mubr.f32.mxu0 0.0
        %587 = vmatmul.mubr.f32.gmra.mrb[0].mxu0 %v520
        %v588 = vpop.f32.mrb[0].mxu0
        %v589 = vadd.f32 %v515, %v588
        %v590 = vpop.f32.mrb[0].mxu0
        %v591 = vadd.f32 %v517, %v590
        %592 = vdwg.mxu0
        %v593 = vlaneseq
        %v594 = vshrl.u32 %v593, 7
        %v595 = vsub.s32 0, %v594
        %v596 = vrot.slane %v409, %v595
        %v597 = vadd.f32 %v589, %v596
        %v598 = vxor.u32 %v597, 2147483648
        %v599 = vmul.f32 %v598, 1.442695
        %v600 = vpow.pop %v599
        %v601 = vadd.f32 %v600, 1.0
        %v602 = vrcp.pop %v601
        %v603 = vmul.f32 1.0, %v602
        %v604 = vmul.f32 %v597, %v603
        %v605 = vlaneseq
        %v606 = vshrl.u32 %v605, 7
        %v607 = vsub.s32 1, %v606
        %v608 = vrot.slane %v409, %v607
        %v609 = vadd.f32 %v591, %v608
        %v610 = vxor.u32 %v609, 2147483648
        %v611 = vmul.f32 %v610, 1.442695
        %v612 = vpow.pop %v611
        %v613 = vadd.f32 %v612, 1.0
        %v614 = vrcp.pop %v613
        %v615 = vmul.f32 1.0, %v614
        %v616 = vmul.f32 %v609, %v615
        %v617 = vld [vmem:[%s338] sm:$0xff]
        %v618 = vld [vmem:[#allocation11] sm:$0xff]
        %v619 = vld [vmem:[#allocation11 + $0x8] sm:$0xff]
        %v620 = vld [vmem:[#allocation11 + $0x10] sm:$0xff]
        %v621 = vld [vmem:[#allocation11 + $0x18] sm:$0xff]
        %v622 = vld [vmem:[#allocation11 + $0x20] sm:$0xff]
        %v623 = vld [vmem:[#allocation11 + $0x28] sm:$0xff]
        %v624 = vld [vmem:[#allocation11 + $0x30] sm:$0xff]
        %v625 = vld [vmem:[#allocation11 + $0x38] sm:$0xff]
        %v626 = vld [vmem:[#allocation11 + $0x40] sm:$0xff]
        %v627 = vld [vmem:[#allocation11 + $0x48] sm:$0xff]
        %v628 = vld [vmem:[#allocation11 + $0x50] sm:$0xff]
        %v629 = vld [vmem:[#allocation11 + $0x58] sm:$0xff]
        %v630 = vld [vmem:[#allocation11 + $0x60] sm:$0xff]
        %v631 = vld [vmem:[#allocation11 + $0x68] sm:$0xff]
        %v632 = vld [vmem:[#allocation11 + $0x70] sm:$0xff]
        %v633 = vld [vmem:[#allocation11 + $0x78] sm:$0xff]
        %v634 = vlaneseq
        %v635 = vshrl.u32 %v634, 7
        %v636 = vsub.s32 2, %v635
        %v637 = vrot.slane %v409, %v636
        %638 = vmatprep.subr.mxu0 0.0
        %639 = vmatpush1.msra.mxu0 %v618
        %640 = vmatprep.subr.mxu0 0.0
        %641 = vmatpush1.msra.mxu0 %v619
        %642 = vmatprep.subr.mxu0 0.0
        %643 = vmatpush1.msra.mxu0 %v620
        %644 = vmatprep.subr.mxu0 0.0
        %645 = vmatpush1.msra.mxu0 %v621
        %646 = vmatprep.subr.mxu0 0.0
        %647 = vmatpush1.msra.mxu0 %v622
        %648 = vmatprep.subr.mxu0 0.0
        %649 = vmatpush1.msra.mxu0 %v623
        %650 = vmatprep.subr.mxu0 0.0
        %651 = vmatpush1.msra.mxu0 %v624
        %652 = vmatprep.subr.mxu0 0.0
        %653 = vmatpush1.msra.mxu0 %v625
        %654 = vmatprep.subr.mxu0 0.0
        %655 = vmatpush1.msra.mxu0 %v626
        %656 = vmatprep.subr.mxu0 0.0
        %657 = vmatpush1.msra.mxu0 %v627
        %658 = vmatprep.subr.mxu0 0.0
        %659 = vmatpush1.msra.mxu0 %v628
        %660 = vmatprep.subr.mxu0 0.0
        %661 = vmatpush1.msra.mxu0 %v629
        %662 = vmatprep.subr.mxu0 0.0
        %663 = vmatpush1.msra.mxu0 %v630
        %664 = vmatprep.subr.mxu0 0.0
        %665 = vmatpush1.msra.mxu0 %v631
        %666 = vmatprep.subr.mxu0 0.0
        %667 = vmatpush1.msra.mxu0 %v632
        %668 = vmatprep.subr.mxu0 0.0
        %669 = vmatpush1.msra.mxu0 %v633
        %670 = vmatprep.subr.mxu0 0.0
        %671 = vmatpush1.msra.mxu0 0.0
        %672 = vmatprep.subr.mxu0 0.0
        %673 = vmatpush1.msra.mxu0 0.0
        %674 = vmatprep.subr.mxu0 0.0
        %675 = vmatpush1.msra.mxu0 0.0
        %676 = vmatprep.subr.mxu0 0.0
        %677 = vmatpush1.msra.mxu0 0.0
        %678 = vmatprep.subr.mxu0 0.0
        %679 = vmatpush1.msra.mxu0 0.0
        %680 = vmatprep.subr.mxu0 0.0
        %681 = vmatpush1.msra.mxu0 0.0
        %682 = vmatprep.subr.mxu0 0.0
        %683 = vmatpush1.msra.mxu0 0.0
        %684 = vmatprep.subr.mxu0 0.0
        %685 = vmatpush1.msra.mxu0 0.0
        %686 = vmatprep.subr.mxu0 0.0
        %687 = vmatpush1.msra.mxu0 0.0
        %688 = vmatprep.subr.mxu0 0.0
        %689 = vmatpush1.msra.mxu0 0.0
        %690 = vmatprep.subr.mxu0 0.0
        %691 = vmatpush1.msra.mxu0 0.0
        %692 = vmatprep.subr.mxu0 0.0
        %693 = vmatpush1.msra.mxu0 0.0
        %694 = vmatprep.subr.mxu0 0.0
        %695 = vmatpush1.msra.mxu0 0.0
        %696 = vmatprep.subr.mxu0 0.0
        %697 = vmatpush1.msra.mxu0 0.0
        %698 = vmatprep.subr.mxu0 0.0
        %699 = vmatpush1.msra.mxu0 0.0
        %700 = vmatprep.subr.mxu0 0.0
        %701 = vmatpush1.msra.mxu0 0.0
        %702 = vmatprep.mubr.f32.mxu0 0.0
        %703 = vmatmul.mubr.f32.gmra.mrb[0].mxu0 %v617
        %v704 = vpop.f32.mrb[0].mxu0
        %v705 = vadd.f32 %v637, %v704
        %v706 = vpop.f32.mrb[0].mxu0
        %707 = vdwg.mxu0
        %708 = vadd.xlane.f32.xlu0 %v705
        %v709 = vpop.xlane.xlu0 %708
        %v710 = vrcp.pop 128.0
        %v711 = vmul.f32 %v709, %v710
        %v712 = vmul.f32 %v705, %v705
        %713 = vadd.xlane.f32.xlu0 %v712
        %v714 = vpop.xlane.xlu0 %713
        %v715 = vmul.f32 %v714, %v710
        %v716 = vmul.f32 %v711, %v711
        %v717 = vsub.f32 %v715, %v716
        %v718 = vsub.f32 %v705, %v711
        %v719 = vadd.f32 %v717, 1e-05
        %v720 = vrsqrt.pop %v719
        %v721 = vmul.f32 %v718, %v720
        %v722 = vlaneseq
        %v723 = vshrl.u32 %v722, 7
        %v724 = vsub.s32 3, %v723
        %v725 = vrot.slane %v409, %v724
        %v726 = vmul.f32 %v721, %v725
        %v727 = vlaneseq
        %v728 = vshrl.u32 %v727, 7
        %v729 = vsub.s32 4, %v728
        %v730 = vrot.slane %v409, %v729
        %v731 = vadd.f32 %v726, %v730
        %v732 = vmul.f32 %v731, %v604
        %v733 = vadd.f32 %v732, %v616
        %v734 = vxor.u32 %v733, 2147483648
        %v735 = vmul.f32 %v734, 1.442695
        %v736 = vpow.pop %v735
        %v737 = vadd.f32 %v736, 1.0
        %v738 = vrcp.pop %v737
        %v739 = vmul.f32 1.0, %v738
        %v740 = vmul.f32 %v733, %v739
        %v741 = vadd.f32 %v740, %v617
        %742 = vst [vmem:[%s408] sm:$0xff] %v741
        %s743 = sand.u32 %s199, 1
        %s744 = scalar_lea.sflag [#allocation4], %s743
        %s745 = sand.u32 %s199, 1
        %s746 = smul.addr %s745, 8
        %s747 = scalar_lea.vmem [#allocation13], %s746
        // Predicated region
        $region73: #{_lambda_.1} parent=47 // pred_check
          %p748 = pneg %p209
        $region74: #{_lambda_.1} parent=47 // pred_check_branch
          %750 = sbr.rel (%p748) target = $region76
        $region75: #{_lambda_.1} parent=47 // pred_region
          %s752 = ssub.s32 128, 128
          %753 = vsyncadd %s744, %s752
          %s754 = smul.addr %s29, 128
          %s755 = scalar_lea.hbm %s7, %s754
          %s757 = sshll.u32 %s747, 4
          %s758 = int_to_ptr.vmem [resolvable:$true] %s757
          %760 = dma.vmem_to_hbm [thread:$0]  %s758, 128, %s755, %s744
        $region76: #{_lambda_.1} parent=47 // pred_fallthru
          _
      $region48: #{_lambda_.1} parent=5 // pred_fallthru
        _
      %p761 = scmp.le.s32.totalorder 2, %s24
      // Predicated region
      $region77: #{_lambda_.1} parent=5 // pred_check
        %p762 = pneg %p761
      $region78: #{_lambda_.1} parent=5 // pred_check_branch
        %764 = sbr.rel (%p762) target = $region80
      $region79: #{_lambda_.1} parent=5 // pred_region
        %s765 = ssub.s32 %s24, 2
        // Predicated region
        $region81: #{_lambda_.1} parent=79 // pred_check
          %p766 = pneg %p215
        $region82: #{_lambda_.1} parent=79 // pred_check_branch
          %768 = sbr.rel (%p766) target = $region84
        $region83: #{_lambda_.1} parent=79 // pred_region
          %s769 = sand.u32 %s200, 1
          %s770 = scalar_lea.sflag [#allocation4], %s769
          %s771 = sand.u32 %s200, 1
          %s772 = smul.addr %s771, 8
          %s773 = scalar_lea.vmem [#allocation13], %s772
          %774 = dma.done %s770, 128
        $region84: #{_lambda_.1} parent=79 // pred_fallthru
          _
      $region80: #{_lambda_.1} parent=5 // pred_fallthru
        _
    $region6: #{_lambda_.1} parent=1 // loop_footer
      %s28 = sadd.s32 1, %s24
    $region7: #{_lambda_.1} parent=1 // loop_footer_branch
      %23 = sbr.rel target = $region3
    $region8: #{_lambda_.1} parent=1 // loop_exit
      _
    %775 = vsyncpa [#allocation3], 1
    %s776 = scalar_lea.sflag [#allocation3], 1
    %777 = vsyncpa %s776, 1
    %778 = vsyncpa [#allocation6], 1
    %s779 = scalar_lea.sflag [#allocation6], 1
    %780 = vsyncpa %s779, 1
    %781 = vsyncpa [#allocation9], 1
    %782 = vsyncpa [#allocation12], 1
    %783 = vsyncpa [#allocation4], 1
    %s784 = scalar_lea.sflag [#allocation4], 1
    %785 = vsyncpa %s784, 1

</llo_original>
